<compile_context>
chip_gen: v5e
topology: v5e:2x2
jax: 0.10.0
libtpu: 0.0.40
codegen_flags: <defaults>
</compile_context>

<pallas_src>
import math

import jax
import jax.numpy as jnp
from jax.experimental import pallas as pl
from jax.experimental.pallas import tpu as pltpu


def _mha_kernel(q_ref, kT_ref, v_ref, wo_ref, bo_ref,
                out_ref, scores_ref,
                acc_ref):
    h = pl.program_id(2)
    last_h = pl.num_programs(2) - 1

    qh = q_ref[0, 0]                    # [TQ, d_k] bf16 (already scaled)
    kT = kT_ref[0, 0]                   # [d_k, S]  bf16 (pre-transposed)
    vh = v_ref[0, 0]                    # [S,  d_v] bf16

    # Pre-softmax scores: plain [TQ, d_k] x [d_k, S] MXU matmul, lane-dense
    # output tile over the full key axis.
    s = jnp.dot(qh, kT, preferred_element_type=jnp.float32)       # [TQ, S] f32
    scores_ref[0, 0] = s                # module's second return value

    # Softmax in f32 over the full key row; reciprocal runs on the EUP slot.
    m = jnp.max(s, axis=-1, keepdims=True)
    e = jnp.exp(s - m)
    w = e * pl.reciprocal(jnp.sum(e, axis=-1, keepdims=True), approx=True)

    ctx = jnp.dot(w.astype(jnp.bfloat16), vh,
                  preferred_element_type=jnp.float32)              # [TQ, d_v]

    @pl.when(h == 0)
    def _():
        acc_ref[...] = jnp.zeros_like(acc_ref)

    # Sum-over-heads output projection (replaces the lane-dim concatenate).
    # wo_ref holds ALL heads (resident, DMA'd once); slice head h here.
    acc_ref[...] += jnp.dot(ctx.astype(jnp.bfloat16), wo_ref[h],
                            preferred_element_type=jnp.float32)    # [TQ, d_model]

    @pl.when(h == last_h)
    def _():
        out_ref[0] = acc_ref[...] + bo_ref[...]


def _pick_tq(S):
    # 256 fills the 256-wide MXU M-dim on v6e/v7x (and is just 2 passes on
    # v5e's 128-wide MXU); fall back to the full (small) sequence otherwise.
    for t in (256, 128):
        if S % t == 0:
            return t
    return S


def _vmem_limit_bytes():
    # ~96 MiB against 128 MiB physical on v5e/v6e, ~48 MiB against 64 MiB on
    # v7x; leaves headroom for compiler-internal scratch.
    try:
        cap = pltpu.get_tpu_info().vmem_capacity_bytes
    except Exception:
        cap = 64 * 1024 * 1024
    return int(min(96 * 1024 * 1024, (cap * 3) // 4))


def multi_head_attention(Q, K, V, params, *, n_heads, d_k, d_v, d_model):
    bs, S, _ = Q.shape
    head_dim = d_model // n_heads
    scale = head_dim ** (-0.5)          # matches _ScaledDotProduct

    wq, bq, wk, bk, wv, bv, wo, bo = params
    assert wq.shape == (d_model, n_heads * d_k)
    assert wk.shape == (d_model, n_heads * d_k)
    assert wv.shape == (d_model, n_heads * d_v)
    assert wo.shape == (n_heads * d_v, d_model)

    def project(X, w, b, d_h):
        # [B, S, d_model] @ [d_model, H*d_h] + b -> [B, H, S, d_h]  (f32 GEMM)
        p = X @ w + b
        return p.reshape(bs, S, n_heads, d_h).transpose(0, 2, 1, 3)

    # Hoisted projections (done once, not per query tile).  Scale folded into
    # q; K is pre-transposed so the in-kernel score matmul needs no relayout.
    qh = (project(Q, wq, bq, d_k) * scale).astype(jnp.bfloat16)       # [B,H,S,d_k]
    khT = project(K, wk, bk, d_k).transpose(0, 1, 3, 2).astype(jnp.bfloat16)  # [B,H,d_k,S]
    vh = project(V, wv, bv, d_v).astype(jnp.bfloat16)                 # [B,H,S,d_v]

    wo_h = wo.reshape(n_heads, d_v, d_model).astype(jnp.bfloat16)     # [H,d_v,d_model]
    bo_2 = bo.reshape(1, d_model).astype(jnp.float32)

    TQ = _pick_tq(S)
    n_q = S // TQ

    out, scores = pl.pallas_call(
        _mha_kernel,
        out_shape=(
            jax.ShapeDtypeStruct((bs, S, d_model), jnp.float32),
            jax.ShapeDtypeStruct((bs, n_heads, S, S), jnp.float32),
        ),
        grid_spec=pltpu.PrefetchScalarGridSpec(
            num_scalar_prefetch=0,
            grid=(bs, n_q, n_heads),
            in_specs=[
                pl.BlockSpec((1, 1, TQ, d_k), lambda b, q, h: (b, h, q, 0)),   # q tile
                pl.BlockSpec((1, 1, d_k, S), lambda b, q, h: (b, h, 0, 0)),    # k^T (per head)
                pl.BlockSpec((1, 1, S, d_v), lambda b, q, h: (b, h, 0, 0)),    # v   (per head)
                pl.BlockSpec((n_heads, d_v, d_model),
                             lambda b, q, h: (0, 0, 0)),                       # Wo (resident)
                pl.BlockSpec((1, d_model), lambda b, q, h: (0, 0)),            # bo (resident)
            ],
            out_specs=(
                pl.BlockSpec((1, TQ, d_model), lambda b, q, h: (b, q, 0)),     # out (acc over h)
                pl.BlockSpec((1, 1, TQ, S), lambda b, q, h: (b, h, q, 0)),     # pre-softmax scores
            ),
            scratch_shapes=[pltpu.VMEM((TQ, d_model), jnp.float32)],
        ),
        compiler_params=pltpu.CompilerParams(
            dimension_semantics=("parallel", "parallel", "arbitrary"),
            vmem_limit_bytes=_vmem_limit_bytes(),
        ),
    )(qh, khT, vh, wo_h, bo_2)
    return out, scores


def reference_mha(Q, K, V, params, *, n_heads, d_k, d_v, d_model):
    """Pure-JAX f32 reference mirroring the PyTorch forward."""
    wq, bq, wk, bk, wv, bv, wo, bo = params
    bs, S, _ = Q.shape
    scale = (d_model // n_heads) ** (-0.5)

    q = (Q @ wq + bq).reshape(bs, S, n_heads, d_k).transpose(0, 2, 1, 3)    # [B,H,S,d_k]
    k = (K @ wk + bk).reshape(bs, S, n_heads, d_k).transpose(0, 2, 3, 1)    # [B,H,d_k,S]
    v = (V @ wv + bv).reshape(bs, S, n_heads, d_v).transpose(0, 2, 1, 3)    # [B,H,S,d_v]

    scores = jnp.einsum("bhqd,bhdk->bhqk", q, k) * scale
    w = jax.nn.softmax(scores, axis=-1)
    ctx = jnp.einsum("bhqk,bhkd->bhqd", w, v)                               # [B,H,S,d_v]
    ctx = ctx.transpose(0, 2, 1, 3).reshape(bs, S, n_heads * d_v)
    out = ctx @ wo + bo
    return out, scores


def init_params(key, d_model, n_heads, d_k, d_v):
    """Deterministic nn.Linear-style init (uniform +/- 1/sqrt(fan_in))."""
    keys = jax.random.split(key, 8)

    def linear(kw, kb, fan_in, fan_out):
        bound = 1.0 / math.sqrt(fan_in)
        w = jax.random.uniform(kw, (fan_in, fan_out), jnp.float32, -bound, bound)
        b = jax.random.uniform(kb, (fan_out,), jnp.float32, -bound, bound)
        return w, b

    wq, bq = linear(keys[0], keys[1], d_model, n_heads * d_k)
    wk, bk = linear(keys[2], keys[3], d_model, n_heads * d_k)
    wv, bv = linear(keys[4], keys[5], d_model, n_heads * d_v)
    wo, bo = linear(keys[6], keys[7], n_heads * d_v, d_model)
    return (wq, bq, wk, bk, wv, bv, wo, bo)


if __name__ == "__main__":
    # Small, forward-consistent shapes: batch=2, seq=8, d_model=32, heads=4.
    bs, S, d_model, n_heads = 2, 8, 32, 4
    d_k = d_model // n_heads
    d_v = d_model // n_heads

    key = jax.random.PRNGKey(0)
    k_q, k_p = jax.random.split(key, 2)
    Q = jax.random.normal(k_q, (bs, S, d_model), jnp.float32)
    # Self-attention path (K is None, V is None in the PyTorch module -> clones of Q).
    K = Q
    V = Q

    params = init_params(k_p, d_model, n_heads, d_k, d_v)

    out, scores = multi_head_attention(Q, K, V, params,
                                       n_heads=n_heads, d_k=d_k, d_v=d_v, d_model=d_model)
    out = jax.block_until_ready(out)
    scores = jax.block_until_ready(scores)

    out_ref, scores_ref = reference_mha(Q, K, V, params,
                                        n_heads=n_heads, d_k=d_k, d_v=d_v, d_model=d_model)

    assert out.shape == (bs, S, d_model)
    assert scores.shape == (bs, n_heads, S, S)
    # bf16 MXU inputs (f32 accumulation) -> loosened tolerance vs the f32 reference.
    assert jnp.allclose(out, out_ref, atol=2e-2, rtol=2e-2), \
        float(jnp.max(jnp.abs(out - out_ref)))
    assert jnp.allclose(scores, scores_ref, atol=2e-2, rtol=2e-2), \
        float(jnp.max(jnp.abs(scores - scores_ref)))

    print("KERNEL_OK")
</pallas_src>

<mosaic_0001>
module attributes {stable_mosaic.version = 11 : i64} {
  func.func @_mha_kernel(%arg0: i32, %arg1: i32, %arg2: i32, %arg3: memref<1x1x8x8xbf16, #tpu.memory_space<vmem>>, %arg4: memref<1x1x8x8xbf16, #tpu.memory_space<vmem>>, %arg5: memref<1x1x8x8xbf16, #tpu.memory_space<vmem>>, %arg6: memref<4x8x32xbf16, #tpu.memory_space<vmem>>, %arg7: memref<1x32xf32, #tpu.memory_space<vmem>>, %arg8: memref<1x8x32xf32, #tpu.memory_space<vmem>>, %arg9: memref<1x1x8x8xf32, #tpu.memory_space<vmem>>, %arg10: memref<8x32xf32, #tpu.memory_space<vmem>>) attributes {dimension_semantics = [#tpu.dimension_semantics<parallel>, #tpu.dimension_semantics<parallel>, #tpu.dimension_semantics<arbitrary>], iteration_bounds = array<i64: 2, 1, 4>, scalar_prefetch = 0 : i64, scratch_operands = 1 : i64, tpu.core_type = #tpu.core_type<tc>, window_params = [{transform_indices = @transform_0, window_bounds = array<i64: 1, 1, 8, 8>}, {transform_indices = @transform_1, window_bounds = array<i64: 1, 1, 8, 8>}, {transform_indices = @transform_2, window_bounds = array<i64: 1, 1, 8, 8>}, {pipeline_mode = #tpu.pipeline_mode<synchronous>, transform_indices = @transform_3, window_bounds = array<i64: 4, 8, 32>}, {pipeline_mode = #tpu.pipeline_mode<synchronous>, transform_indices = @transform_4, window_bounds = array<i64: 1, 32>}, {transform_indices = @transform_5, window_bounds = array<i64: 1, 8, 32>}, {transform_indices = @transform_6, window_bounds = array<i64: 1, 1, 8, 8>}]} {
    %c0 = arith.constant 0 : index
    %c0_0 = arith.constant 0 : index
    %c0_1 = arith.constant 0 : index
    %c0_2 = arith.constant 0 : index
    %0 = vector.load %arg3[%c0, %c0_0, %c0_1, %c0_2] : memref<1x1x8x8xbf16, #tpu.memory_space<vmem>>, vector<1x1x8x8xbf16>
    %1 = vector.shape_cast %0 : vector<1x1x8x8xbf16> to vector<8x8xbf16>
    %c0_3 = arith.constant 0 : index
    %c0_4 = arith.constant 0 : index
    %c0_5 = arith.constant 0 : index
    %c0_6 = arith.constant 0 : index
    %2 = vector.load %arg4[%c0_3, %c0_4, %c0_5, %c0_6] : memref<1x1x8x8xbf16, #tpu.memory_space<vmem>>, vector<1x1x8x8xbf16>
    %3 = vector.shape_cast %2 : vector<1x1x8x8xbf16> to vector<8x8xbf16>
    %c0_7 = arith.constant 0 : index
    %c0_8 = arith.constant 0 : index
    %c0_9 = arith.constant 0 : index
    %c0_10 = arith.constant 0 : index
    %4 = vector.load %arg5[%c0_7, %c0_8, %c0_9, %c0_10] : memref<1x1x8x8xbf16, #tpu.memory_space<vmem>>, vector<1x1x8x8xbf16>
    %5 = vector.shape_cast %4 : vector<1x1x8x8xbf16> to vector<8x8xbf16>
    %cst = arith.constant dense<0.000000e+00> : vector<8x8xf32>
    %6 = tpu.matmul %1, %3, %cst {dimension_numbers = #tpu.dot_dimension_numbers<[1], [0], [0], [1], [0, 0, 1, 1], [], []>} : vector<8x8xbf16>, vector<8x8xbf16>, vector<8x8xf32> -> vector<8x8xf32>
    %c0_11 = arith.constant 0 : index
    %c0_12 = arith.constant 0 : index
    %c0_13 = arith.constant 0 : index
    %c0_14 = arith.constant 0 : index
    %7 = vector.load %arg9[%c0_11, %c0_12, %c0_13, %c0_14] : memref<1x1x8x8xf32, #tpu.memory_space<vmem>>, vector<1x1x8x8xf32>
    %8 = vector.shape_cast %7 : vector<1x1x8x8xf32> to vector<8x8xf32>
    %9 = vector.shape_cast %6 : vector<8x8xf32> to vector<1x1x8x8xf32>
    tpu.vector_store %arg9[%c0_11, %c0_12, %c0_13, %c0_14], %9 {strides = array<i32>} : memref<1x1x8x8xf32, #tpu.memory_space<vmem>>, vector<1x1x8x8xf32>,
    %cst_15 = arith.constant dense<0xFF800000> : vector<8xf32>
    %10 = vector.multi_reduction <maximumf>, %6, %cst_15 [1] : vector<8x8xf32> to vector<8xf32>
    %11 = vector.shape_cast %10 : vector<8xf32> to vector<8x1xf32>
    %12 = vector.broadcast %11 : vector<8x1xf32> to vector<8x8xf32>
    %13 = arith.subf %6, %12 : vector<8x8xf32>
    %14 = math.exp %13 : vector<8x8xf32>
    %cst_16 = arith.constant dense<0.000000e+00> : vector<8xf32>
    %15 = vector.multi_reduction <add>, %14, %cst_16 [1] : vector<8x8xf32> to vector<8xf32>
    %16 = vector.shape_cast %15 : vector<8xf32> to vector<8x1xf32>
    %17 = tpu.reciprocal %16 {approx = true} : vector<8x1xf32> -> vector<8x1xf32>
    %18 = vector.broadcast %17 : vector<8x1xf32> to vector<8x8xf32>
    %19 = arith.mulf %14, %18 : vector<8x8xf32>
    %20 = arith.truncf %19 : vector<8x8xf32> to vector<8x8xbf16>
    %cst_17 = arith.constant dense<0.000000e+00> : vector<8x8xf32>
    %21 = tpu.matmul %20, %5, %cst_17 {dimension_numbers = #tpu.dot_dimension_numbers<[1], [0], [0], [1], [0, 0, 1, 1], [], []>} : vector<8x8xbf16>, vector<8x8xbf16>, vector<8x8xf32> -> vector<8x8xf32>
    %c0_i32 = arith.constant 0 : i32
    %22 = arith.cmpi eq, %arg2, %c0_i32 : i32
    %23 = arith.extui %22 : i1 to i32
    %c0_i32_18 = arith.constant 0 : i32
    %24 = arith.cmpi ne, %23, %c0_i32_18 : i32
    scf.if %24 {
      %cst_27 = arith.constant 0.000000e+00 : f32
      %36 = vector.broadcast %cst_27 : f32 to vector<8x32xf32>
      %c0_28 = arith.constant 0 : index
      %c0_29 = arith.constant 0 : index
      %37 = vector.load %arg10[%c0_28, %c0_29] : memref<8x32xf32, #tpu.memory_space<vmem>>, vector<8x32xf32>
      tpu.vector_store %arg10[%c0_28, %c0_29], %36 {strides = array<i32>} : memref<8x32xf32, #tpu.memory_space<vmem>>, vector<8x32xf32>,
    } else {
    }
    %c0_19 = arith.constant 0 : index
    %c0_20 = arith.constant 0 : index
    %25 = vector.load %arg10[%c0_19, %c0_20] : memref<8x32xf32, #tpu.memory_space<vmem>>, vector<8x32xf32>
    %26 = arith.truncf %21 : vector<8x8xf32> to vector<8x8xbf16>
    %27 = arith.index_cast %arg2 : i32 to index
    %c0_21 = arith.constant 0 : index
    %c0_22 = arith.constant 0 : index
    %28 = vector.load %arg6[%27, %c0_21, %c0_22] : memref<4x8x32xbf16, #tpu.memory_space<vmem>>, vector<1x8x32xbf16>
    %29 = vector.shape_cast %28 : vector<1x8x32xbf16> to vector<8x32xbf16>
    %cst_23 = arith.constant dense<0.000000e+00> : vector<8x32xf32>
    %30 = tpu.matmul %26, %29, %cst_23 {dimension_numbers = #tpu.dot_dimension_numbers<[1], [0], [0], [1], [0, 0, 1, 1], [], []>} : vector<8x8xbf16>, vector<8x32xbf16>, vector<8x32xf32> -> vector<8x32xf32>
    %31 = arith.addf %25, %30 : vector<8x32xf32>
    %c0_24 = arith.constant 0 : index
    %c0_25 = arith.constant 0 : index
    %32 = vector.load %arg10[%c0_24, %c0_25] : memref<8x32xf32, #tpu.memory_space<vmem>>, vector<8x32xf32>
    tpu.vector_store %arg10[%c0_24, %c0_25], %31 {strides = array<i32>} : memref<8x32xf32, #tpu.memory_space<vmem>>, vector<8x32xf32>,
    %c3_i32 = arith.constant 3 : i32
    %33 = arith.cmpi eq, %arg2, %c3_i32 : i32
    %34 = arith.extui %33 : i1 to i32
    %c0_i32_26 = arith.constant 0 : i32
    %35 = arith.cmpi ne, %34, %c0_i32_26 : i32
    scf.if %35 {
      %c0_27 = arith.constant 0 : index
      %c0_28 = arith.constant 0 : index
      %36 = vector.load %arg10[%c0_27, %c0_28] : memref<8x32xf32, #tpu.memory_space<vmem>>, vector<8x32xf32>
      %c0_29 = arith.constant 0 : index
      %c0_30 = arith.constant 0 : index
      %37 = vector.load %arg7[%c0_29, %c0_30] : memref<1x32xf32, #tpu.memory_space<vmem>>, vector<1x32xf32>
      %38 = vector.broadcast %37 : vector<1x32xf32> to vector<8x32xf32>
      %39 = arith.addf %36, %38 : vector<8x32xf32>
      %c0_31 = arith.constant 0 : index
      %c0_32 = arith.constant 0 : index
      %c0_33 = arith.constant 0 : index
      %40 = vector.load %arg8[%c0_31, %c0_32, %c0_33] : memref<1x8x32xf32, #tpu.memory_space<vmem>>, vector<1x8x32xf32>
      %41 = vector.shape_cast %40 : vector<1x8x32xf32> to vector<8x32xf32>
      %42 = vector.shape_cast %39 : vector<8x32xf32> to vector<1x8x32xf32>
      tpu.vector_store %arg8[%c0_31, %c0_32, %c0_33], %42 {strides = array<i32>} : memref<1x8x32xf32, #tpu.memory_space<vmem>>, vector<1x8x32xf32>,
    } else {
    }
    return
  }
  func.func @transform_0(%arg0: i32, %arg1: i32, %arg2: i32) -> (i32, i32, i32, i32) {
    %c0_i32 = arith.constant 0 : i32
    %c0_i32_0 = arith.constant 0 : i32
    return %arg0, %arg2, %arg1, %c0_i32 : i32, i32, i32, i32
  }
  func.func @transform_1(%arg0: i32, %arg1: i32, %arg2: i32) -> (i32, i32, i32, i32) {
    %c0_i32 = arith.constant 0 : i32
    %c0_i32_0 = arith.constant 0 : i32
    %c0_i32_1 = arith.constant 0 : i32
    return %arg0, %arg2, %c0_i32, %c0_i32_0 : i32, i32, i32, i32
  }
  func.func @transform_2(%arg0: i32, %arg1: i32, %arg2: i32) -> (i32, i32, i32, i32) {
    %c0_i32 = arith.constant 0 : i32
    %c0_i32_0 = arith.constant 0 : i32
    %c0_i32_1 = arith.constant 0 : i32
    return %arg0, %arg2, %c0_i32, %c0_i32_0 : i32, i32, i32, i32
  }
  func.func @transform_3(%arg0: i32, %arg1: i32, %arg2: i32) -> (i32, i32, i32) {
    %c0_i32 = arith.constant 0 : i32
    %c0_i32_0 = arith.constant 0 : i32
    %c0_i32_1 = arith.constant 0 : i32
    %c0_i32_2 = arith.constant 0 : i32
    return %c0_i32, %c0_i32_0, %c0_i32_1 : i32, i32, i32
  }
  func.func @transform_4(%arg0: i32, %arg1: i32, %arg2: i32) -> (i32, i32) {
    %c0_i32 = arith.constant 0 : i32
    %c0_i32_0 = arith.constant 0 : i32
    %c0_i32_1 = arith.constant 0 : i32
    return %c0_i32, %c0_i32_0 : i32, i32
  }
  func.func @transform_5(%arg0: i32, %arg1: i32, %arg2: i32) -> (i32, i32, i32) {
    %c0_i32 = arith.constant 0 : i32
    %c0_i32_0 = arith.constant 0 : i32
    return %arg0, %arg1, %c0_i32 : i32, i32, i32
  }
  func.func @transform_6(%arg0: i32, %arg1: i32, %arg2: i32) -> (i32, i32, i32, i32) {
    %c0_i32 = arith.constant 0 : i32
    %c0_i32_0 = arith.constant 0 : i32
    return %arg0, %arg2, %arg1, %c0_i32 : i32, i32, i32, i32
  }
}

</mosaic_0001>

<llo_original>
// kernel: tpu_custom_call.1
$region0: #{tpu_custom_call.1}
  #allocation0 [shape = 'u32[]', space=smem, size = 0x4, offset = 0x4, fixed_abs, tag = 'smem constant byte address 0x4 - core index']
  #allocation1 [shape = 'u32[72,128]{1,0:T(1,128)}', space=vmem, size = 0x9000, scoped, tag = 'internal scratch']
  #allocation2 [shape = 'f32[8,32]{1,0:T(8,128)}', space=vmem, size = 0x1000, scoped, tag = 'scratch operand']
  %s0 = inlined_call_operand.hbm [shape: bf16[2,4,8,8], index: 0, kind: input, shape index: {}]
  %s1 = inlined_call_operand.hbm [shape: bf16[2,4,8,8], index: 1, kind: input, shape index: {}]
  %s2 = inlined_call_operand.hbm [shape: bf16[2,4,8,8], index: 2, kind: input, shape index: {}]
  %s3 = inlined_call_operand.hbm [shape: bf16[4,8,32], index: 3, kind: input, shape index: {}]
  %s4 = inlined_call_operand.vmem [shape: f32[1,32], index: 4, kind: input, shape index: {}]
  %s5 = inlined_call_operand.hbm [shape: f32[2,8,32], index: 5, kind: output, shape index: {0}]
  %s6 = inlined_call_operand.hbm [shape: f32[2,4,8,8], index: 6, kind: output, shape index: {1}]
  %7 = xla_tuple %s5, %s6
  %s8 = sld [smem:[#allocation0]]
  $region85: #{tpu_custom_call.1} parent=0
    _
  %s10 = ssub.s32 1, %s8
  %s11 = scalar_select 0, %s10, %s8
  $region1: #{tpu_custom_call.1} parent=0
    #allocation3 [shape = 'u8[4096]{0}', space=vmem, size = 0x1000, scoped, tag = 'input window, operand 0']
    #allocation4 [shape = 's32[2]{0}', space=sflag, size = 0x8, scoped, tag = 'scoped memory for tpu_custom_call.1']
    #allocation5 [shape = 's32[2]{0}', space=sflag, size = 0x8, scoped, tag = 'scoped memory for tpu_custom_call.1']
    #allocation6 [shape = 'u8[4096]{0}', space=vmem, size = 0x1000, scoped, tag = 'input window, operand 1']
    #allocation7 [shape = 's32[2]{0}', space=sflag, size = 0x8, scoped, tag = 'scoped memory for tpu_custom_call.1']
    #allocation8 [shape = 'u8[4096]{0}', space=vmem, size = 0x1000, scoped, tag = 'input window, operand 2']
    #allocation9 [shape = 'u8[8192]{0}', space=vmem, size = 0x2000, scoped, tag = 'input window, operand 3, single buffered']
    #allocation10 [shape = 's32[1]{0}', space=sflag, size = 0x4, scoped, tag = 'scoped memory for tpu_custom_call.1']
    #allocation11 [shape = 'u8[8192]{0}', space=vmem, size = 0x2000, scoped, tag = 'output window, operand 0']
    #allocation12 [shape = 'u8[8192]{0}', space=vmem, size = 0x2000, scoped, tag = 'output window, operand 1']
    #allocation13 [shape = 's32[2]{0}', space=sflag, size = 0x8, scoped, tag = 'scoped memory for tpu_custom_call.1']
    %12 = vsyncpa [#allocation4], 0
    %s13 = scalar_lea.sflag [#allocation4], 1
    %14 = vsyncpa %s13, 0
    %15 = vsyncpa [#allocation7], 0
    %s16 = scalar_lea.sflag [#allocation7], 1
    %17 = vsyncpa %s16, 0
    %18 = vsyncpa [#allocation10], 0
    %19 = vsyncpa [#allocation5], 0
    %s20 = scalar_lea.sflag [#allocation5], 1
    %21 = vsyncpa %s20, 0
    %22 = vsyncpa [#allocation13], 0
    %s23 = scalar_lea.sflag [#allocation13], 1
    %24 = vsyncpa %s23, 0
    loop: start=0, step=1, limit=10
    $region2: #{tpu_custom_call.1} parent=1 // loop_pre_header
      _
    $region3: #{tpu_custom_call.1} parent=1 // loop_header
      %s26 = sphi 0, %s30
      %p27 = scmp.ge.s32.totalorder %s26, 10
      %s33 = sphi 0, %s52
      %s34 = sphi 0, %s48
      %s35 = sphi 0, %s44
      %s36 = sphi 0, %s33
      %s37 = sphi 0, %s34
      %s38 = sphi 0, %s35
      %s39 = sphi 0, %s36
      %s40 = sphi 0, %s37
      %s41 = sphi 0, %s38
      %s59 = sphi 0, %s61
      %s62 = sphi 0, %s59
      %s63 = sphi 0, %s62
      %s79 = sphi 0, %s63
      %s87 = sphi 0, %s89
      %s90 = sphi 0, %s87
      %s91 = sphi 0, %s90
      %s107 = sphi 0, %s91
      %s115 = sphi 0, %s117
      %s118 = sphi 0, %s115
      %s119 = sphi 0, %s118
      %s135 = sphi 0, %s119
      %s139 = sphi 0, %s139
      %s141 = sphi 0, %s139
      %s142 = sphi 0, %s141
      %s156 = sphi 0, %s142
      %s160 = sphi 0, %s160
      %s162 = sphi 0, %s160
      %s163 = sphi 0, %s162
      %s177 = sphi 0, %s163
      %s185 = sphi 0, %s187
      %s188 = sphi 0, %s185
      %s189 = sphi 0, %s188
      %s205 = sphi 0, %s189
      %s215 = sphi 0, %s217
      %s218 = sphi 0, %s215
      %s219 = sphi 0, %s218
      %s235 = sphi 0, %s219
    $region4: #{tpu_custom_call.1} parent=1 // loop_header_branch
      %29 = sbr.rel (%p27) target = $region8
    $region5: #{tpu_custom_call.1} parent=1 // loop_body
      %s31 = ssub.s32 %s26, 1
      %s32 = ssub.s32 %s26, 2
      %s42 = sadd.s32 1, %s35
      %p43 = scmp.ge.s32.totalorder %s42, 4
      %s44 = scalar_select %p43, 0, %s42
      %s45 = sadd.s32 1, %s34
      %s46 = scalar_select %p43, %s45, %s34
      %p47 = scmp.ge.s32.totalorder %s46, 1
      %s48 = scalar_select %p47, 0, %s46
      %s49 = sadd.s32 1, %s33
      %s50 = scalar_select %p47, %s49, %s33
      %p51 = scmp.ge.s32.totalorder %s50, 2
      %s52 = scalar_select %p51, 0, %s50
      %s53 = ssub.s32 %s33, %s52
      %s54 = ssub.s32 %s35, %s44
      %s55 = sor.u32 %s53, %s54
      %s56 = ssub.s32 %s34, %s48
      %s57 = sor.u32 %s55, %s56
      %p58 = scmp.eq.s32.totalorder %s57, 0
      %s60 = sadd.s32 %s59, 1
      %s61 = scalar_select %p58, %s59, %s60
      %p64 = pneg %p58
      %p65 = scmp.eq.s32.totalorder %s26, 7
      %p66 = por %p64, %p65
      %p67 = scmp.ne.s32.totalorder %s59, %s62
      %p68 = scmp.eq.s32.totalorder %s26, 0
      %p69 = por %p67, %p68
      %p70 = scmp.ne.s32.totalorder %s59, %s62
      %p71 = scmp.eq.s32.totalorder %s31, 7
      %p72 = por %p70, %p71
      %p73 = scmp.ne.s32.totalorder %s62, %s63
      %p74 = scmp.eq.s32.totalorder %s31, 0
      %p75 = por %p73, %p74
      %p76 = scmp.ne.s32.totalorder %s62, %s63
      %p77 = scmp.eq.s32.totalorder %s32, 7
      %p78 = por %p76, %p77
      %p80 = scmp.ne.s32.totalorder %s63, %s79
      %p81 = scmp.eq.s32.totalorder %s32, 0
      %p82 = por %p80, %p81
      %s83 = ssub.s32 %s33, %s52
      %s84 = ssub.s32 %s35, %s44
      %s85 = sor.u32 %s83, %s84
      %p86 = scmp.eq.s32.totalorder %s85, 0
      %s88 = sadd.s32 %s87, 1
      %s89 = scalar_select %p86, %s87, %s88
      %p92 = pneg %p86
      %p93 = scmp.eq.s32.totalorder %s26, 7
      %p94 = por %p92, %p93
      %p95 = scmp.ne.s32.totalorder %s87, %s90
      %p96 = scmp.eq.s32.totalorder %s26, 0
      %p97 = por %p95, %p96
      %p98 = scmp.ne.s32.totalorder %s87, %s90
      %p99 = scmp.eq.s32.totalorder %s31, 7
      %p100 = por %p98, %p99
      %p101 = scmp.ne.s32.totalorder %s90, %s91
      %p102 = scmp.eq.s32.totalorder %s31, 0
      %p103 = por %p101, %p102
      %p104 = scmp.ne.s32.totalorder %s90, %s91
      %p105 = scmp.eq.s32.totalorder %s32, 7
      %p106 = por %p104, %p105
      %p108 = scmp.ne.s32.totalorder %s91, %s107
      %p109 = scmp.eq.s32.totalorder %s32, 0
      %p110 = por %p108, %p109
      %s111 = ssub.s32 %s33, %s52
      %s112 = ssub.s32 %s35, %s44
      %s113 = sor.u32 %s111, %s112
      %p114 = scmp.eq.s32.totalorder %s113, 0
      %s116 = sadd.s32 %s115, 1
      %s117 = scalar_select %p114, %s115, %s116
      %p120 = pneg %p114
      %p121 = scmp.eq.s32.totalorder %s26, 7
      %p122 = por %p120, %p121
      %p123 = scmp.ne.s32.totalorder %s115, %s118
      %p124 = scmp.eq.s32.totalorder %s26, 0
      %p125 = por %p123, %p124
      %p126 = scmp.ne.s32.totalorder %s115, %s118
      %p127 = scmp.eq.s32.totalorder %s31, 7
      %p128 = por %p126, %p127
      %p129 = scmp.ne.s32.totalorder %s118, %s119
      %p130 = scmp.eq.s32.totalorder %s31, 0
      %p131 = por %p129, %p130
      %p132 = scmp.ne.s32.totalorder %s118, %s119
      %p133 = scmp.eq.s32.totalorder %s32, 7
      %p134 = por %p132, %p133
      %p136 = scmp.ne.s32.totalorder %s119, %s135
      %p137 = scmp.eq.s32.totalorder %s32, 0
      %p138 = por %p136, %p137
      %s140 = sadd.s32 %s139, 1
      %p143 = scmp.eq.s32.totalorder %s26, 7
      %p144 = scmp.ne.s32.totalorder %s139, %s141
      %p145 = scmp.eq.s32.totalorder %s26, 0
      %p146 = por %p144, %p145
      %p147 = scmp.ne.s32.totalorder %s139, %s141
      %p148 = scmp.eq.s32.totalorder %s31, 7
      %p149 = por %p147, %p148
      %p150 = scmp.ne.s32.totalorder %s141, %s142
      %p151 = scmp.eq.s32.totalorder %s31, 0
      %p152 = por %p150, %p151
      %p153 = scmp.ne.s32.totalorder %s141, %s142
      %p154 = scmp.eq.s32.totalorder %s32, 7
      %p155 = por %p153, %p154
      %p157 = scmp.ne.s32.totalorder %s142, %s156
      %p158 = scmp.eq.s32.totalorder %s32, 0
      %p159 = por %p157, %p158
      %s161 = sadd.s32 %s160, 1
      %p164 = scmp.eq.s32.totalorder %s26, 7
      %p165 = scmp.ne.s32.totalorder %s160, %s162
      %p166 = scmp.eq.s32.totalorder %s26, 0
      %p167 = por %p165, %p166
      %p168 = scmp.ne.s32.totalorder %s160, %s162
      %p169 = scmp.eq.s32.totalorder %s31, 7
      %p170 = por %p168, %p169
      %p171 = scmp.ne.s32.totalorder %s162, %s163
      %p172 = scmp.eq.s32.totalorder %s31, 0
      %p173 = por %p171, %p172
      %p174 = scmp.ne.s32.totalorder %s162, %s163
      %p175 = scmp.eq.s32.totalorder %s32, 7
      %p176 = por %p174, %p175
      %p178 = scmp.ne.s32.totalorder %s163, %s177
      %p179 = scmp.eq.s32.totalorder %s32, 0
      %p180 = por %p178, %p179
      %s181 = ssub.s32 %s33, %s52
      %s182 = ssub.s32 %s34, %s48
      %s183 = sor.u32 %s181, %s182
      %p184 = scmp.eq.s32.totalorder %s183, 0
      %s186 = sadd.s32 %s185, 1
      %s187 = scalar_select %p184, %s185, %s186
      %p190 = pneg %p184
      %p191 = scmp.eq.s32.totalorder %s26, 7
      %p192 = por %p190, %p191
      %p193 = scmp.ne.s32.totalorder %s185, %s188
      %p194 = scmp.eq.s32.totalorder %s26, 0
      %p195 = por %p193, %p194
      %p196 = scmp.ne.s32.totalorder %s185, %s188
      %p197 = scmp.eq.s32.totalorder %s31, 7
      %p198 = por %p196, %p197
      %p199 = scmp.ne.s32.totalorder %s188, %s189
      %p200 = scmp.eq.s32.totalorder %s31, 0
      %p201 = por %p199, %p200
      %p202 = scmp.ne.s32.totalorder %s188, %s189
      %p203 = scmp.eq.s32.totalorder %s32, 7
      %p204 = por %p202, %p203
      %p206 = scmp.ne.s32.totalorder %s189, %s205
      %p207 = scmp.eq.s32.totalorder %s32, 0
      %p208 = por %p206, %p207
      %s209 = ssub.s32 %s33, %s52
      %s210 = ssub.s32 %s35, %s44
      %s211 = sor.u32 %s209, %s210
      %s212 = ssub.s32 %s34, %s48
      %s213 = sor.u32 %s211, %s212
      %p214 = scmp.eq.s32.totalorder %s213, 0
      %s216 = sadd.s32 %s215, 1
      %s217 = scalar_select %p214, %s215, %s216
      %p220 = pneg %p214
      %p221 = scmp.eq.s32.totalorder %s26, 7
      %p222 = por %p220, %p221
      %p223 = scmp.ne.s32.totalorder %s215, %s218
      %p224 = scmp.eq.s32.totalorder %s26, 0
      %p225 = por %p223, %p224
      %p226 = scmp.ne.s32.totalorder %s215, %s218
      %p227 = scmp.eq.s32.totalorder %s31, 7
      %p228 = por %p226, %p227
      %p229 = scmp.ne.s32.totalorder %s218, %s219
      %p230 = scmp.eq.s32.totalorder %s31, 0
      %p231 = por %p229, %p230
      %p232 = scmp.ne.s32.totalorder %s218, %s219
      %p233 = scmp.eq.s32.totalorder %s32, 7
      %p234 = por %p232, %p233
      %p236 = scmp.ne.s32.totalorder %s219, %s235
      %p237 = scmp.eq.s32.totalorder %s32, 0
      %p238 = por %p236, %p237
      %p239 = scmp.le.s32.totalorder 1, %s26
      %p240 = scmp.lt.s32.totalorder %s26, 9
      %p241 = pnand %p239, %p240
      %p242 = pneg %p241
      // Predicated region
      $region9: #{tpu_custom_call.1} parent=5 // pred_check
        _
      $region10: #{tpu_custom_call.1} parent=5 // pred_check_branch
        %244 = sbr.rel (%p241) target = $region12
      $region11: #{tpu_custom_call.1} parent=5 // pred_region
        %s245 = ssub.s32 %s26, 1
        // Predicated region
        $region13: #{tpu_custom_call.1} parent=11 // pred_check
          %p246 = pneg %p152
        $region14: #{tpu_custom_call.1} parent=11 // pred_check_branch
          %248 = sbr.rel (%p246) target = $region16
        $region15: #{tpu_custom_call.1} parent=11 // pred_region
          %250 = vsyncadd [#allocation10], 0
          %s251 = sshll.u32 %s3, 4
          %s252 = int_to_ptr.hbm [resolvable:$true] %s251
          %s253 = sshll.u32 [#allocation9], 4
          %s254 = int_to_ptr.vmem [resolvable:$true] %s253
          %259 = dma.hbm_to_vmem [thread:$0]  %s252, 256, %s254, [#allocation10], 64, 64, 4
        $region16: #{tpu_custom_call.1} parent=11 // pred_fallthru
          _
        // Predicated region
        $region17: #{tpu_custom_call.1} parent=11 // pred_check
          %p260 = pneg %p173
        $region18: #{tpu_custom_call.1} parent=11 // pred_check_branch
          %262 = sbr.rel (%p260) target = $region20
        $region19: #{tpu_custom_call.1} parent=11 // pred_region
          _
        $region20: #{tpu_custom_call.1} parent=11 // pred_fallthru
          _
      $region12: #{tpu_custom_call.1} parent=5 // pred_fallthru
        _
      %p263 = scmp.lt.s32.totalorder %s26, 8
      // Predicated region
      $region21: #{tpu_custom_call.1} parent=5 // pred_check
        %p264 = pneg %p263
      $region22: #{tpu_custom_call.1} parent=5 // pred_check_branch
        %266 = sbr.rel (%p264) target = $region24
      $region23: #{tpu_custom_call.1} parent=5 // pred_region
        // Predicated region
        $region25: #{tpu_custom_call.1} parent=23 // pred_check
          %p267 = pneg %p69
        $region26: #{tpu_custom_call.1} parent=23 // pred_check_branch
          %269 = sbr.rel (%p267) target = $region28
        $region27: #{tpu_custom_call.1} parent=23 // pred_region
          %s270 = sand.u32 %s59, 1
          %s271 = scalar_lea.sflag [#allocation4], %s270
          %s272 = sand.u32 %s59, 1
          %s273 = smul.addr %s272, 4
          %s274 = scalar_lea.vmem [#allocation3], %s273
          %276 = vsyncadd %s271, 0
          %s277 = sadd.s32 %s34, %s35
          %s278 = smul.addr %s33, 4
          %s279 = sadd.s32 %s277, %s278
          %s280 = smul.addr %s279, 4
          %s281 = scalar_lea.hbm %s0, %s280
          %s283 = sshll.u32 %s281, 4
          %s284 = int_to_ptr.hbm [resolvable:$true] %s283
          %s285 = sshll.u32 %s274, 4
          %s286 = int_to_ptr.vmem [resolvable:$true] %s285
          %288 = dma.hbm_to_vmem [thread:$0]  %s284, 64, %s286, %s271
        $region28: #{tpu_custom_call.1} parent=23 // pred_fallthru
          _
        // Predicated region
        $region29: #{tpu_custom_call.1} parent=23 // pred_check
          %p289 = pneg %p97
        $region30: #{tpu_custom_call.1} parent=23 // pred_check_branch
          %291 = sbr.rel (%p289) target = $region32
        $region31: #{tpu_custom_call.1} parent=23 // pred_region
          %s292 = sand.u32 %s26, 1
          %s293 = scalar_lea.sflag [#allocation7], %s292
          %s294 = sand.u32 %s87, 1
          %s295 = smul.addr %s294, 4
          %s296 = scalar_lea.vmem [#allocation6], %s295
          %298 = vsyncadd %s293, 0
          %s299 = smul.addr %s33, 4
          %s300 = sadd.s32 %s35, %s299
          %s301 = smul.addr %s300, 4
          %s302 = scalar_lea.hbm %s1, %s301
          %s304 = sshll.u32 %s302, 4
          %s305 = int_to_ptr.hbm [resolvable:$true] %s304
          %s306 = sshll.u32 %s296, 4
          %s307 = int_to_ptr.vmem [resolvable:$true] %s306
          %309 = dma.hbm_to_vmem [thread:$0]  %s305, 64, %s307, %s293
        $region32: #{tpu_custom_call.1} parent=23 // pred_fallthru
          _
        // Predicated region
        $region33: #{tpu_custom_call.1} parent=23 // pred_check
          %p310 = pneg %p125
        $region34: #{tpu_custom_call.1} parent=23 // pred_check_branch
          %312 = sbr.rel (%p310) target = $region36
        $region35: #{tpu_custom_call.1} parent=23 // pred_region
          %s313 = sand.u32 %s26, 1
          %s314 = scalar_lea.sflag [#allocation7], %s313
          %s315 = sand.u32 %s115, 1
          %s316 = smul.addr %s315, 4
          %s317 = scalar_lea.vmem [#allocation8], %s316
          %319 = vsyncadd %s314, 0
          %s320 = smul.addr %s33, 4
          %s321 = sadd.s32 %s35, %s320
          %s322 = smul.addr %s321, 4
          %s323 = scalar_lea.hbm %s2, %s322
          %s325 = sshll.u32 %s323, 4
          %s326 = int_to_ptr.hbm [resolvable:$true] %s325
          %s327 = sshll.u32 %s317, 4
          %s328 = int_to_ptr.vmem [resolvable:$true] %s327
          %330 = dma.hbm_to_vmem [thread:$0]  %s326, 64, %s328, %s314
        $region36: #{tpu_custom_call.1} parent=23 // pred_fallthru
          _
      $region24: #{tpu_custom_call.1} parent=5 // pred_fallthru
        _
      %p331 = scmp.le.s32.totalorder 1, %s26
      %p332 = scmp.lt.s32.totalorder %s26, 9
      %p333 = pnand %p331, %p332
      %p334 = pneg %p333
      // Predicated region
      $region37: #{tpu_custom_call.1} parent=5 // pred_check
        _
      $region38: #{tpu_custom_call.1} parent=5 // pred_check_branch
        %336 = sbr.rel (%p333) target = $region40
      $region39: #{tpu_custom_call.1} parent=5 // pred_region
        %s337 = ssub.s32 %s26, 1
        %s338 = sand.u32 %s62, 1
        %s339 = scalar_lea.sflag [#allocation4], %s338
        %s340 = sand.u32 %s62, 1
        %s341 = smul.addr %s340, 4
        %s342 = scalar_lea.vmem [#allocation3], %s341
        // Predicated region
        $region41: #{tpu_custom_call.1} parent=39 // pred_check
          %p343 = pneg %p75
        $region42: #{tpu_custom_call.1} parent=39 // pred_check_branch
          %345 = sbr.rel (%p343) target = $region44
        $region43: #{tpu_custom_call.1} parent=39 // pred_region
          %347 = dma.done %s339, 64
        $region44: #{tpu_custom_call.1} parent=39 // pred_fallthru
          _
        %s348 = sand.u32 %s31, 1
        %s349 = scalar_lea.sflag [#allocation7], %s348
        %s350 = sand.u32 %s90, 1
        %s351 = smul.addr %s350, 4
        %s352 = scalar_lea.vmem [#allocation6], %s351
        // Predicated region
        $region45: #{tpu_custom_call.1} parent=39 // pred_check
          %p353 = pneg %p103
        $region46: #{tpu_custom_call.1} parent=39 // pred_check_branch
          %355 = sbr.rel (%p353) target = $region48
        $region47: #{tpu_custom_call.1} parent=39 // pred_region
          %357 = dma.done %s349, 64
        $region48: #{tpu_custom_call.1} parent=39 // pred_fallthru
          _
        %s358 = sand.u32 %s31, 1
        %s359 = scalar_lea.sflag [#allocation7], %s358
        %s360 = sand.u32 %s118, 1
        %s361 = smul.addr %s360, 4
        %s362 = scalar_lea.vmem [#allocation8], %s361
        // Predicated region
        $region49: #{tpu_custom_call.1} parent=39 // pred_check
          %p363 = pneg %p131
        $region50: #{tpu_custom_call.1} parent=39 // pred_check_branch
          %365 = sbr.rel (%p363) target = $region52
        $region51: #{tpu_custom_call.1} parent=39 // pred_region
          %367 = dma.done %s359, 64
        $region52: #{tpu_custom_call.1} parent=39 // pred_fallthru
          _
        // Predicated region
        $region53: #{tpu_custom_call.1} parent=39 // pred_check
          %p368 = pneg %p152
        $region54: #{tpu_custom_call.1} parent=39 // pred_check_branch
          %370 = sbr.rel (%p368) target = $region56
        $region55: #{tpu_custom_call.1} parent=39 // pred_region
          %372 = dma.done [#allocation10], 256
        $region56: #{tpu_custom_call.1} parent=39 // pred_fallthru
          _
        %s373 = sand.u32 %s62, 1
        %s374 = scalar_lea.sflag [#allocation4], %s373
        %s375 = sand.u32 %s62, 1
        %s376 = smul.addr %s375, 4
        %s377 = scalar_lea.vmem [#allocation3], %s376
        %p378 = pneg %p75
        %p379 = pneg %p72
        %s380 = sand.u32 %s31, 1
        %s381 = scalar_lea.sflag [#allocation7], %s380
        %s382 = sand.u32 %s90, 1
        %s383 = smul.addr %s382, 4
        %s384 = scalar_lea.vmem [#allocation6], %s383
        %p385 = pneg %p103
        %p386 = pneg %p100
        %s387 = sand.u32 %s31, 1
        %s388 = scalar_lea.sflag [#allocation7], %s387
        %s389 = sand.u32 %s118, 1
        %s390 = smul.addr %s389, 4
        %s391 = scalar_lea.vmem [#allocation8], %s390
        %p392 = pneg %p131
        %p393 = pneg %p128
        %p394 = pneg %p152
        %p395 = pneg %p149
        %p396 = pneg %p173
        %p397 = pneg %p170
        %p398 = pneg %p201
        %p399 = pneg %p198
        %s400 = sand.u32 %s188, 1
        %s401 = scalar_lea.sflag [#allocation5], %s400
        %s402 = sand.u32 %s188, 1
        %s403 = smul.addr %s402, 8
        %s404 = scalar_lea.vmem [#allocation11], %s403
        %p405 = pneg %p231
        %p406 = pneg %p228
        %s407 = sand.u32 %s218, 1
        %s408 = scalar_lea.sflag [#allocation13], %s407
        %s409 = sand.u32 %s218, 1
        %s410 = smul.addr %s409, 8
        %s411 = scalar_lea.vmem [#allocation12], %s410
        %v413 = vld [vmem:[%s342] sm:$0xf]
        %v414 = vld [vmem:[%s352] sm:$0xf]
        %v415 = vld [vmem:[%s362] sm:$0xf]
        %vm416 = vcmask 64512
        %v418 = vsel %vm416, %v413, 0
        %vm420 = vcmask 1043456
        %v422 = vsel %vm420, %v414, 0
        %424 = vmatpush.bf16.msra.mxu0 0
        %425 = vmatpush.bf16.msra.mxu0 0
        %426 = vmatpush.bf16.msra.mxu0 0
        %427 = vmatpush.bf16.msra.mxu0 0
        %428 = vmatpush.bf16.msra.mxu0 0
        %429 = vmatpush.bf16.msra.mxu0 0
        %430 = vmatpush.bf16.msra.mxu0 0
        %431 = vmatpush.bf16.msra.mxu0 %v422
        %432 = vmatmul.bf16.gmra.mxu0 %v418
        %v433 = vpop.f32.mrf.mxu0
        %v434 = vadd.f32 0.0, %v433
        %v435 = vpop.f32.mrf.mxu0
        %436 = vdwg.mxu0
        %437 = vst.msk [vmem:[%s411] sm:$0xff] %vm416, %v434
        %v438 = vsel %vm416, %v434, -inf
        %439 = vmax.xlane.f32.xlu0 %v438
        %v440 = vpop.xlane.xlu0 %439
        %v441 = vsub.f32 %v434, %v440
        %v442 = vmul.f32 %v441, 1.442695
        %v443 = vpow.pop %v442
        %v444 = vsel %vm416, %v443, 0.0
        %445 = vadd.xlane.f32.xlu0 %v444
        %v446 = vpop.xlane.xlu0 %445
        %v447 = vrcp.pop %v446
        %v448 = vmul.f32 %v443, %v447
        %v449 = vpack.c.bf16 %v448, %v448
        %v451 = vsel %vm416, %v449, 0
        %v454 = vsel %vm420, %v415, 0
        %456 = vmatpush.bf16.msra.mxu0 0
        %457 = vmatpush.bf16.msra.mxu0 0
        %458 = vmatpush.bf16.msra.mxu0 0
        %459 = vmatpush.bf16.msra.mxu0 0
        %460 = vmatpush.bf16.msra.mxu0 0
        %461 = vmatpush.bf16.msra.mxu0 0
        %462 = vmatpush.bf16.msra.mxu0 0
        %463 = vmatpush.bf16.msra.mxu0 %v454
        %464 = vmatmul.bf16.gmra.mxu0 %v451
        %v465 = vpop.f32.mrf.mxu0
        %v466 = vadd.f32 0.0, %v465
        %v467 = vpop.f32.mrf.mxu0
        %468 = vdwg.mxu0
        %p469 = scmp.eq.s32.totalorder %s38, 0
        // Predicated region
        $region57: #{tpu_custom_call.1} parent=39 // pred_check
          %p470 = pneg %p469
        $region58: #{tpu_custom_call.1} parent=39 // pred_check_branch
          %472 = sbr.rel (%p470) target = $region60
        $region59: #{tpu_custom_call.1} parent=39 // pred_region
          %vm473 = vcmask 261120
          %474 = vst.msk [vmem:[#allocation2] sm:$0xff] %vm473, 0.0
        $region60: #{tpu_custom_call.1} parent=39 // pred_fallthru
          _
        %v475 = vld [vmem:[#allocation2] sm:$0xff]
        %v476 = vpack.c.bf16 %v466, %v466
        %s477 = smul.addr %s38, 4
        %s478 = scalar_lea.vmem [#allocation9], %s477
        %v479 = vld [vmem:[%s478] sm:$0xf]
        %v481 = vsel %vm416, %v476, 0
        %v484 = vsel %vm420, %v479, 0
        %486 = vmatpush.bf16.msra.mxu0 0
        %487 = vmatpush.bf16.msra.mxu0 0
        %488 = vmatpush.bf16.msra.mxu0 0
        %489 = vmatpush.bf16.msra.mxu0 0
        %490 = vmatpush.bf16.msra.mxu0 0
        %491 = vmatpush.bf16.msra.mxu0 0
        %492 = vmatpush.bf16.msra.mxu0 0
        %493 = vmatpush.bf16.msra.mxu0 %v484
        %494 = vmatmul.bf16.gmra.mxu0 %v481
        %v495 = vpop.f32.mrf.mxu0
        %v496 = vadd.f32 0.0, %v495
        %v497 = vpop.f32.mrf.mxu0
        %498 = vdwg.mxu0
        %v499 = vadd.f32 %v475, %v496
        %vm500 = vcmask 261120
        %501 = vst.msk [vmem:[#allocation2] sm:$0xff] %vm500, %v499
        %p502 = scmp.eq.s32.totalorder %s38, 3
        // Predicated region
        $region61: #{tpu_custom_call.1} parent=39 // pred_check
          %p503 = pneg %p502
        $region62: #{tpu_custom_call.1} parent=39 // pred_check_branch
          %505 = sbr.rel (%p503) target = $region64
        $region63: #{tpu_custom_call.1} parent=39 // pred_region
          %v506 = vld [vmem:[#allocation2] sm:$0xff]
          %v507 = vld [vmem:[%s4] sm:$0x1]
          %v509 = vperm.slane %v507, 0
          %v511 = vadd.f32 %v506, %v509
          %512 = vst.msk [vmem:[%s404] sm:$0xff] %vm500, %v511
        $region64: #{tpu_custom_call.1} parent=39 // pred_fallthru
          _
        %s513 = sand.u32 %s188, 1
        %s514 = scalar_lea.sflag [#allocation5], %s513
        %s515 = sand.u32 %s188, 1
        %s516 = smul.addr %s515, 8
        %s517 = scalar_lea.vmem [#allocation11], %s516
        %s518 = sand.u32 %s218, 1
        %s519 = scalar_lea.sflag [#allocation13], %s518
        %s520 = sand.u32 %s218, 1
        %s521 = smul.addr %s520, 8
        %s522 = scalar_lea.vmem [#allocation12], %s521
        // Predicated region
        $region65: #{tpu_custom_call.1} parent=39 // pred_check
          %p523 = pneg %p198
        $region66: #{tpu_custom_call.1} parent=39 // pred_check_branch
          %525 = sbr.rel (%p523) target = $region68
        $region67: #{tpu_custom_call.1} parent=39 // pred_region
          %527 = vsyncadd %s514, 0
          %s528 = sadd.s32 %s37, %s36
          %s529 = smul.addr %s528, 8
          %s530 = scalar_lea.hbm %s5, %s529
          %s532 = sshll.u32 %s517, 4
          %s533 = int_to_ptr.vmem [resolvable:$true] %s532
          %s534 = sshll.u32 %s530, 4
          %s535 = int_to_ptr.hbm [resolvable:$true] %s534
          %537 = dma.vmem_to_hbm [thread:$0]  %s533, 128, %s535, %s514
        $region68: #{tpu_custom_call.1} parent=39 // pred_fallthru
          _
        // Predicated region
        $region69: #{tpu_custom_call.1} parent=39 // pred_check
          %p538 = pneg %p228
        $region70: #{tpu_custom_call.1} parent=39 // pred_check_branch
          %540 = sbr.rel (%p538) target = $region72
        $region71: #{tpu_custom_call.1} parent=39 // pred_region
          %542 = vsyncadd %s519, 0
          %s543 = sadd.s32 %s37, %s38
          %s544 = smul.addr %s36, 4
          %s545 = sadd.s32 %s543, %s544
          %s546 = smul.addr %s545, 8
          %s547 = scalar_lea.hbm %s6, %s546
          %s549 = sshll.u32 %s522, 4
          %s550 = int_to_ptr.vmem [resolvable:$true] %s549
          %s551 = sshll.u32 %s547, 4
          %s552 = int_to_ptr.hbm [resolvable:$true] %s551
          %554 = dma.vmem_to_hbm [thread:$0]  %s550, 128, %s552, %s519
        $region72: #{tpu_custom_call.1} parent=39 // pred_fallthru
          _
      $region40: #{tpu_custom_call.1} parent=5 // pred_fallthru
        _
      %p555 = scmp.le.s32.totalorder 2, %s26
      // Predicated region
      $region73: #{tpu_custom_call.1} parent=5 // pred_check
        %p556 = pneg %p555
      $region74: #{tpu_custom_call.1} parent=5 // pred_check_branch
        %558 = sbr.rel (%p556) target = $region76
      $region75: #{tpu_custom_call.1} parent=5 // pred_region
        %s559 = ssub.s32 %s26, 2
        // Predicated region
        $region77: #{tpu_custom_call.1} parent=75 // pred_check
          %p560 = pneg %p204
        $region78: #{tpu_custom_call.1} parent=75 // pred_check_branch
          %562 = sbr.rel (%p560) target = $region80
        $region79: #{tpu_custom_call.1} parent=75 // pred_region
          %s563 = sand.u32 %s189, 1
          %s564 = scalar_lea.sflag [#allocation5], %s563
          %s565 = sand.u32 %s189, 1
          %s566 = smul.addr %s565, 8
          %s567 = scalar_lea.vmem [#allocation11], %s566
          %569 = dma.done %s564, 128
        $region80: #{tpu_custom_call.1} parent=75 // pred_fallthru
          _
        // Predicated region
        $region81: #{tpu_custom_call.1} parent=75 // pred_check
          %p570 = pneg %p234
        $region82: #{tpu_custom_call.1} parent=75 // pred_check_branch
          %572 = sbr.rel (%p570) target = $region84
        $region83: #{tpu_custom_call.1} parent=75 // pred_region
          %s573 = sand.u32 %s219, 1
          %s574 = scalar_lea.sflag [#allocation13], %s573
          %s575 = sand.u32 %s219, 1
          %s576 = smul.addr %s575, 8
          %s577 = scalar_lea.vmem [#allocation12], %s576
          %579 = dma.done %s574, 128
        $region84: #{tpu_custom_call.1} parent=75 // pred_fallthru
          _
      $region76: #{tpu_custom_call.1} parent=5 // pred_fallthru
        _
    $region6: #{tpu_custom_call.1} parent=1 // loop_footer
      %s30 = sadd.s32 1, %s26
    $region7: #{tpu_custom_call.1} parent=1 // loop_footer_branch
      %25 = sbr.rel target = $region3
    $region8: #{tpu_custom_call.1} parent=1 // loop_exit
      _
    %580 = vsyncpa [#allocation4], 1
    %s581 = scalar_lea.sflag [#allocation4], 1
    %582 = vsyncpa %s581, 1
    %583 = vsyncpa [#allocation7], 1
    %s584 = scalar_lea.sflag [#allocation7], 1
    %585 = vsyncpa %s584, 1
    %586 = vsyncpa [#allocation10], 1
    %587 = vsyncpa [#allocation5], 1
    %s588 = scalar_lea.sflag [#allocation5], 1
    %589 = vsyncpa %s588, 1
    %590 = vsyncpa [#allocation13], 1
    %s591 = scalar_lea.sflag [#allocation13], 1
    %592 = vsyncpa %s591, 1

</llo_original>
